<compile_context>
chip_gen: v6e
topology: v6e:2x2x1
jax: 0.10.0
libtpu: 0.0.40
codegen_flags: <defaults>
</compile_context>

<pallas_src>
import functools

import jax
import jax.numpy as jnp
from jax.experimental import pallas as pl
from jax.experimental.pallas import tpu as pltpu


def _round_up(x, m):
    return (x + m - 1) // m * m


# -----------------------------------------------------------------------------
# Fused kernel: grid = (2, num_tiles); axis 0 is the phase.
#   phase 0: y_tile = W @ P_tile  (Cout on sublanes, rows on lanes),
#            accumulate per-channel sum / sum-of-squares in persistent scratch,
#            keep y_tile resident in VMEM (resident mode).
#   phase 1: scale = rsqrt(var+eps), bias = -mean*scale (gamma=1, beta=0),
#            out_tile = relu(y_tile*scale + bias).  y_tile is read back from
#            the VMEM scratch, or recomputed from the patches tile when the
#            conv output is too large to stay resident (v7x VMEM cap).
# -----------------------------------------------------------------------------
def _fused_aspp_kernel(p_ref, w_ref, o_ref, y_ref, s_ref, q_ref, *,
                       rows, eps, resident):
    phase = pl.program_id(0)
    i = pl.program_id(1)
    inv_rows = 1.0 / float(rows)

    @pl.when(jnp.logical_and(phase == 0, i == 0))
    def _():
        s_ref[...] = jnp.zeros_like(s_ref)
        q_ref[...] = jnp.zeros_like(q_ref)

    @pl.when(phase == 0)
    def _():
        # (Cout_sub, K) @ (K, TM) -> (Cout_sub, TM); K is not 128-padded.
        y = jnp.dot(w_ref[...], p_ref[...], preferred_element_type=jnp.float32)
        if resident:
            y_ref[i] = y
        # Zero-padded rows / channels contribute exactly 0 to both partials.
        s_ref[:, 0:1] += jnp.sum(y, axis=1, keepdims=True)
        q_ref[:, 0:1] += jnp.sum(y * y, axis=1, keepdims=True)

    @pl.when(phase == 1)
    def _():
        mean = s_ref[:, 0:1] * inv_rows
        var = jnp.maximum(q_ref[:, 0:1] * inv_rows - mean * mean, 0.0)
        scale = jax.lax.rsqrt(var + eps)     # gamma = 1
        bias = -mean * scale                 # beta  = 0
        if resident:
            y = y_ref[i]
        else:
            y = jnp.dot(w_ref[...], p_ref[...],
                        preferred_element_type=jnp.float32)
        o_ref[...] = jnp.maximum(y * scale + bias, 0.0).astype(o_ref.dtype)


def aspp_forward(x_nchw, weight_oihw, *, padding, dilation, eps=1e-5,
                 max_row_tile=1024, resident_vmem_budget=16 * 1024 * 1024):
    """Pallas implementation of _ASPPModule.forward.

    x_nchw:      (N, Cin, H, W)      float32
    weight_oihw: (Cout, Cin, KH, KW) float32  (conv weight, no bias)
    returns:     (N, Cout, H_out, W_out) float32
    """
    n, cin, h, w = x_nchw.shape
    cout, cin_w, kh, kw = weight_oihw.shape
    assert cin == cin_w
    ph, pw = (padding, padding) if isinstance(padding, int) else padding
    dh, dw = (dilation, dilation) if isinstance(dilation, int) else dilation

    h_out = h + 2 * ph - dh * (kh - 1)
    w_out = w + 2 * pw - dw * (kw - 1)
    assert h_out > 0 and w_out > 0

    rows = n * h_out * w_out
    k_full = kh * kw * cin               # contraction dim; NOT padded to 128
    cout_sub = _round_up(cout, 8)        # Cout on sublanes: pad to 8, not 128

    # Row (lane) tiling: aim for >= 4 pipelined tiles, 128..1024 lanes each,
    # and cap the double-buffered patch tile at ~8 MiB for huge k_full.
    rows128 = _round_up(rows, 128)
    tm = min(max_row_tile, max(128, (rows128 // 4) // 128 * 128))
    tm = min(tm, max(128, (8 * 1024 * 1024 // (8 * k_full)) // 128 * 128))
    rows_pad = _round_up(rows, tm)
    num_tiles = rows_pad // tm

    # Keep the conv output resident in VMEM between phases when it fits the
    # budget (sized for v7x: 64 MiB physical / 32 MiB default scoped VMEM);
    # otherwise recompute the conv tile in phase 1 (still no HBM intermediate).
    resident = cout_sub * rows_pad * 4 <= resident_vmem_budget

    # ---- wrapper-side layout plumbing (plain JAX) ---------------------------
    # im2col, TRANSPOSED: patches^T (k_full, rows_pad) so rows are lane-dense
    # and Cout lands on sublanes inside the kernel.
    # TODO(synk): for production ASPP channel counts (Cin >= 256) do not
    # materialize im2col in HBM; loop the kh*kw taps as a grid axis instead.
    x_pad = jnp.pad(x_nchw, ((0, 0), (0, 0), (ph, ph), (pw, pw)))
    taps = []
    for ki in range(kh):
        for kj in range(kw):
            taps.append(
                x_pad[:, :, ki * dh:ki * dh + h_out, kj * dw:kj * dw + w_out])
    # (KH*KW, N, Cin, Ho, Wo) -> (KH*KW, Cin, N, Ho, Wo) -> (k_full, rows)
    pt = jnp.stack(taps, axis=0)
    pt = jnp.transpose(pt, (0, 2, 1, 3, 4)).reshape(k_full, rows)
    pt = jnp.pad(pt, ((0, 0), (0, rows_pad - rows)))

    # Weight OIHW -> (Cout, KH, KW, Cin) -> (Cout, k_full); pad Cout to 8-mult.
    wt = jnp.transpose(weight_oihw, (0, 2, 3, 1)).reshape(cout, k_full)
    wt = jnp.pad(wt, ((0, cout_sub - cout), (0, 0)))

    # Patches index map: phase 1 pins block 0 in resident mode (no re-DMA);
    # in recompute mode phase 1 re-reads the per-tile patch block.
    patches_index = ((lambda p, i: (0, i * (1 - p))) if resident
                     else (lambda p, i: (0, i)))

    kernel = functools.partial(_fused_aspp_kernel, rows=rows, eps=eps,
                               resident=resident)

    cost = pl.CostEstimate(
        flops=2 * rows_pad * k_full * cout_sub * (1 if resident else 2),
        transcendentals=num_tiles * cout_sub,
        bytes_accessed=4 * (k_full * rows_pad * (1 if resident else 2)
                            + cout_sub * k_full + cout_sub * rows_pad))

    out2d = pl.pallas_call(
        kernel,
        out_shape=jax.ShapeDtypeStruct((cout_sub, rows_pad), jnp.float32),
        grid=(2, num_tiles),
        in_specs=[
            pl.BlockSpec((k_full, tm), patches_index),
            pl.BlockSpec((cout_sub, k_full), lambda p, i: (0, 0)),
        ],
        out_specs=pl.BlockSpec((cout_sub, tm), lambda p, i: (0, i * p)),
        scratch_shapes=[
            pltpu.VMEM((num_tiles, cout_sub, tm) if resident
                       else (1, cout_sub, 128), jnp.float32),
            pltpu.VMEM((cout_sub, 128), jnp.float32),
            pltpu.VMEM((cout_sub, 128), jnp.float32),
        ],
        compiler_params=pltpu.CompilerParams(
            # Phase 1 depends on global stats from phase 0 -> sequential grid.
            dimension_semantics=("arbitrary", "arbitrary"),
            vmem_limit_bytes=32 * 1024 * 1024),
        cost_estimate=cost,
    )(pt, wt)

    # Crop padded channels/rows BEFORE the (small) layout transpose to NCHW.
    out = out2d[:cout, :rows].reshape(cout, n, h_out, w_out)
    return jnp.transpose(out, (1, 0, 2, 3))


# -----------------------------------------------------------------------------
# Pure-JAX reference (lax conv + training-mode BN + ReLU)
# -----------------------------------------------------------------------------
def _reference(x_nchw, weight_oihw, *, padding, dilation, eps=1e-5):
    ph, pw = (padding, padding) if isinstance(padding, int) else padding
    dh, dw = (dilation, dilation) if isinstance(dilation, int) else dilation
    y = jax.lax.conv_general_dilated(
        x_nchw, weight_oihw, window_strides=(1, 1),
        padding=((ph, ph), (pw, pw)), rhs_dilation=(dh, dw),
        dimension_numbers=("NCHW", "OIHW", "NCHW"))
    mean = jnp.mean(y, axis=(0, 2, 3), keepdims=True)
    var = jnp.mean((y - mean) ** 2, axis=(0, 2, 3), keepdims=True)
    return jnp.maximum((y - mean) * jax.lax.rsqrt(var + eps), 0.0)


if __name__ == "__main__":
    # Module config: _ASPPModule(in_channels=4, out_channels=8, kernel_size=3,
    #                            padding=2, dilation=2)
    in_channels, out_channels = 4, 8
    kernel_size, padding, dilation = 3, 2, 2
    N, H, W = 2, 16, 16

    key = jax.random.PRNGKey(0)
    kx, kw_ = jax.random.split(key)
    x = jax.random.normal(kx, (N, in_channels, H, W), dtype=jnp.float32)

    # Deterministic kaiming_normal_ init (fan_in mode, gain=sqrt(2)).
    fan_in = in_channels * kernel_size * kernel_size
    std = (2.0 / fan_in) ** 0.5
    weight = std * jax.random.normal(
        kw_, (out_channels, in_channels, kernel_size, kernel_size),
        dtype=jnp.float32)

    # TODO(synk): BatchNorm2d running_mean/running_var buffer updates (a
    # training-mode side effect) are not materialized; forward output uses
    # batch statistics exactly like PyTorch training-mode BN with gamma=1,
    # beta=0.
    out = aspp_forward(x, weight, padding=padding, dilation=dilation)
    out = jax.block_until_ready(out)

    ref = _reference(x, weight, padding=padding, dilation=dilation)
    assert out.shape == (N, out_channels, H, W), out.shape
    assert jnp.allclose(out, ref, rtol=1e-4, atol=1e-4), float(
        jnp.max(jnp.abs(out - ref)))

    print("KERNEL_OK")
</pallas_src>

<mosaic_0001>
module attributes {stable_mosaic.version = 11 : i64} {
  func.func @_fused_aspp_kernel(%arg0: i32, %arg1: i32, %arg2: memref<36x128xf32, #tpu.memory_space<vmem>>, %arg3: memref<8x36xf32, #tpu.memory_space<vmem>>, %arg4: memref<8x128xf32, #tpu.memory_space<vmem>>, %arg5: memref<4x8x128xf32, #tpu.memory_space<vmem>>, %arg6: memref<8x128xf32, #tpu.memory_space<vmem>>, %arg7: memref<8x128xf32, #tpu.memory_space<vmem>>) attributes {dimension_semantics = [#tpu.dimension_semantics<arbitrary>, #tpu.dimension_semantics<arbitrary>], iteration_bounds = array<i64: 2, 4>, scalar_prefetch = 0 : i64, scratch_operands = 3 : i64, tpu.core_type = #tpu.core_type<tc>, window_params = [{transform_indices = @transform_0, window_bounds = array<i64: 36, 128>}, {pipeline_mode = #tpu.pipeline_mode<synchronous>, transform_indices = @transform_1, window_bounds = array<i64: 8, 36>}, {transform_indices = @transform_2, window_bounds = array<i64: 8, 128>}]} {
    %c0_i32 = arith.constant 0 : i32
    %0 = arith.cmpi eq, %arg0, %c0_i32 : i32
    %c0_i32_0 = arith.constant 0 : i32
    %1 = arith.cmpi eq, %arg1, %c0_i32_0 : i32
    %2 = arith.andi %0, %1 : i1
    %3 = arith.extui %2 : i1 to i32
    %c0_i32_1 = arith.constant 0 : i32
    %4 = arith.cmpi ne, %3, %c0_i32_1 : i32
    scf.if %4 {
      %cst = arith.constant 0.000000e+00 : f32
      %11 = vector.broadcast %cst : f32 to vector<8x128xf32>
      %c0 = arith.constant 0 : index
      %c0_5 = arith.constant 0 : index
      %12 = vector.load %arg6[%c0, %c0_5] : memref<8x128xf32, #tpu.memory_space<vmem>>, vector<8x128xf32>
      tpu.vector_store %arg6[%c0, %c0_5], %11 {strides = array<i32>} : memref<8x128xf32, #tpu.memory_space<vmem>>, vector<8x128xf32>,
      %cst_6 = arith.constant 0.000000e+00 : f32
      %13 = vector.broadcast %cst_6 : f32 to vector<8x128xf32>
      %c0_7 = arith.constant 0 : index
      %c0_8 = arith.constant 0 : index
      %14 = vector.load %arg7[%c0_7, %c0_8] : memref<8x128xf32, #tpu.memory_space<vmem>>, vector<8x128xf32>
      tpu.vector_store %arg7[%c0_7, %c0_8], %13 {strides = array<i32>} : memref<8x128xf32, #tpu.memory_space<vmem>>, vector<8x128xf32>,
    } else {
    }
    %c0_i32_2 = arith.constant 0 : i32
    %5 = arith.cmpi eq, %arg0, %c0_i32_2 : i32
    %6 = arith.extui %5 : i1 to i32
    %c0_i32_3 = arith.constant 0 : i32
    %7 = arith.cmpi ne, %6, %c0_i32_3 : i32
    scf.if %7 {
      %c0 = arith.constant 0 : index
      %c0_5 = arith.constant 0 : index
      %11 = vector.load %arg3[%c0, %c0_5] : memref<8x36xf32, #tpu.memory_space<vmem>>, vector<8x36xf32>
      %c0_6 = arith.constant 0 : index
      %c0_7 = arith.constant 0 : index
      %12 = vector.load %arg2[%c0_6, %c0_7] : memref<36x128xf32, #tpu.memory_space<vmem>>, vector<36x128xf32>
      %cst = arith.constant dense<0.000000e+00> : vector<8x128xf32>
      %13 = tpu.matmul %11, %12, %cst {dimension_numbers = #tpu.dot_dimension_numbers<[1], [0], [0], [1], [0, 0, 1, 1], [], []>} : vector<8x36xf32>, vector<36x128xf32>, vector<8x128xf32> -> vector<8x128xf32>
      %14 = arith.index_cast %arg1 : i32 to index
      %c0_8 = arith.constant 0 : index
      %c0_9 = arith.constant 0 : index
      %15 = vector.load %arg5[%14, %c0_8, %c0_9] : memref<4x8x128xf32, #tpu.memory_space<vmem>>, vector<1x8x128xf32>
      %16 = vector.shape_cast %15 : vector<1x8x128xf32> to vector<8x128xf32>
      %17 = vector.shape_cast %13 : vector<8x128xf32> to vector<1x8x128xf32>
      tpu.vector_store %arg5[%14, %c0_8, %c0_9], %17 {strides = array<i32>} : memref<4x8x128xf32, #tpu.memory_space<vmem>>, vector<1x8x128xf32>,
      %c0_10 = arith.constant 0 : index
      %c0_11 = arith.constant 0 : index
      %18 = vector.load %arg6[%c0_10, %c0_11] : memref<8x128xf32, #tpu.memory_space<vmem>>, vector<8x1xf32>
      %cst_12 = arith.constant dense<0.000000e+00> : vector<8xf32>
      %19 = vector.multi_reduction <add>, %13, %cst_12 [1] : vector<8x128xf32> to vector<8xf32>
      %20 = vector.shape_cast %19 : vector<8xf32> to vector<8x1xf32>
      %21 = arith.addf %18, %20 : vector<8x1xf32>
      %c0_13 = arith.constant 0 : index
      %c0_14 = arith.constant 0 : index
      %22 = vector.load %arg6[%c0_13, %c0_14] : memref<8x128xf32, #tpu.memory_space<vmem>>, vector<8x1xf32>
      tpu.vector_store %arg6[%c0_13, %c0_14], %21 {strides = array<i32>} : memref<8x128xf32, #tpu.memory_space<vmem>>, vector<8x1xf32>,
      %c0_15 = arith.constant 0 : index
      %c0_16 = arith.constant 0 : index
      %23 = vector.load %arg7[%c0_15, %c0_16] : memref<8x128xf32, #tpu.memory_space<vmem>>, vector<8x1xf32>
      %24 = arith.mulf %13, %13 : vector<8x128xf32>
      %cst_17 = arith.constant dense<0.000000e+00> : vector<8xf32>
      %25 = vector.multi_reduction <add>, %24, %cst_17 [1] : vector<8x128xf32> to vector<8xf32>
      %26 = vector.shape_cast %25 : vector<8xf32> to vector<8x1xf32>
      %27 = arith.addf %23, %26 : vector<8x1xf32>
      %c0_18 = arith.constant 0 : index
      %c0_19 = arith.constant 0 : index
      %28 = vector.load %arg7[%c0_18, %c0_19] : memref<8x128xf32, #tpu.memory_space<vmem>>, vector<8x1xf32>
      tpu.vector_store %arg7[%c0_18, %c0_19], %27 {strides = array<i32>} : memref<8x128xf32, #tpu.memory_space<vmem>>, vector<8x1xf32>,
    } else {
    }
    %c1_i32 = arith.constant 1 : i32
    %8 = arith.cmpi eq, %arg0, %c1_i32 : i32
    %9 = arith.extui %8 : i1 to i32
    %c0_i32_4 = arith.constant 0 : i32
    %10 = arith.cmpi ne, %9, %c0_i32_4 : i32
    scf.if %10 {
      %c0 = arith.constant 0 : index
      %c0_5 = arith.constant 0 : index
      %11 = vector.load %arg6[%c0, %c0_5] : memref<8x128xf32, #tpu.memory_space<vmem>>, vector<8x1xf32>
      %cst = arith.constant 0.001953125 : f32
      %12 = vector.broadcast %cst : f32 to vector<8x1xf32>
      %13 = arith.mulf %11, %12 : vector<8x1xf32>
      %c0_6 = arith.constant 0 : index
      %c0_7 = arith.constant 0 : index
      %14 = vector.load %arg7[%c0_6, %c0_7] : memref<8x128xf32, #tpu.memory_space<vmem>>, vector<8x1xf32>
      %cst_8 = arith.constant 0.001953125 : f32
      %15 = vector.broadcast %cst_8 : f32 to vector<8x1xf32>
      %16 = arith.mulf %14, %15 : vector<8x1xf32>
      %17 = arith.mulf %13, %13 : vector<8x1xf32>
      %18 = arith.subf %16, %17 : vector<8x1xf32>
      %cst_9 = arith.constant 0.000000e+00 : f32
      %19 = vector.broadcast %cst_9 : f32 to vector<8x1xf32>
      %20 = arith.maximumf %18, %19 : vector<8x1xf32>
      %cst_10 = arith.constant 9.99999974E-6 : f32
      %21 = vector.broadcast %cst_10 : f32 to vector<8x1xf32>
      %22 = arith.addf %20, %21 : vector<8x1xf32>
      %23 = math.rsqrt %22 : vector<8x1xf32>
      %cst_11 = arith.constant 0.000000e+00 : f32
      %24 = vector.broadcast %cst_11 : f32 to vector<8x1xf32>
      %25 = arith.subf %24, %13 : vector<8x1xf32>
      %26 = arith.mulf %25, %23 : vector<8x1xf32>
      %27 = arith.index_cast %arg1 : i32 to index
      %c0_12 = arith.constant 0 : index
      %c0_13 = arith.constant 0 : index
      %28 = vector.load %arg5[%27, %c0_12, %c0_13] : memref<4x8x128xf32, #tpu.memory_space<vmem>>, vector<1x8x128xf32>
      %29 = vector.shape_cast %28 : vector<1x8x128xf32> to vector<8x128xf32>
      %30 = vector.broadcast %23 : vector<8x1xf32> to vector<8x128xf32>
      %31 = arith.mulf %29, %30 : vector<8x128xf32>
      %32 = vector.broadcast %26 : vector<8x1xf32> to vector<8x128xf32>
      %33 = arith.addf %31, %32 : vector<8x128xf32>
      %cst_14 = arith.constant 0.000000e+00 : f32
      %34 = vector.broadcast %cst_14 : f32 to vector<8x128xf32>
      %35 = arith.maximumf %33, %34 : vector<8x128xf32>
      %c0_15 = arith.constant 0 : index
      %c0_16 = arith.constant 0 : index
      %36 = vector.load %arg4[%c0_15, %c0_16] : memref<8x128xf32, #tpu.memory_space<vmem>>, vector<8x128xf32>
      tpu.vector_store %arg4[%c0_15, %c0_16], %35 {strides = array<i32>} : memref<8x128xf32, #tpu.memory_space<vmem>>, vector<8x128xf32>,
    } else {
    }
    return
  }
  func.func @transform_0(%arg0: i32, %arg1: i32) -> (i32, i32) {
    %c1_i32 = arith.constant 1 : i32
    %0 = arith.subi %c1_i32, %arg0 : i32
    %1 = arith.muli %arg1, %0 : i32
    %c0_i32 = arith.constant 0 : i32
    %c0_i32_0 = arith.constant 0 : i32
    return %c0_i32, %1 : i32, i32
  }
  func.func @transform_1(%arg0: i32, %arg1: i32) -> (i32, i32) {
    %c0_i32 = arith.constant 0 : i32
    %c0_i32_0 = arith.constant 0 : i32
    %c0_i32_1 = arith.constant 0 : i32
    return %c0_i32, %c0_i32_0 : i32, i32
  }
  func.func @transform_2(%arg0: i32, %arg1: i32) -> (i32, i32) {
    %0 = arith.muli %arg1, %arg0 : i32
    %c0_i32 = arith.constant 0 : i32
    %c0_i32_0 = arith.constant 0 : i32
    return %c0_i32, %0 : i32, i32
  }
}

</mosaic_0001>

<llo_original>
// kernel: tpu_custom_call.1
$region0: #{tpu_custom_call.1}
  #allocation0 [shape = 'u32[]', space=smem, size = 0x4, offset = 0x4, fixed_abs, tag = 'smem constant byte address 0x4 - core index']
  #allocation1 [shape = 'u32[144,128]{1,0:T(1,128)}', space=vmem, size = 0x12000, scoped, tag = 'internal scratch']
  #allocation2 [shape = 'f32[4,8,128]{2,1,0:T(8,128)}', space=vmem, size = 0x4000, scoped, tag = 'scratch operand']
  #allocation3 [shape = 'f32[8,128]{1,0:T(8,128)}', space=vmem, size = 0x1000, scoped, tag = 'scratch operand']
  #allocation4 [shape = 'f32[8,128]{1,0:T(8,128)}', space=vmem, size = 0x1000, scoped, tag = 'scratch operand']
  %s0 = inlined_call_operand.hbm [shape: f32[36,512], index: 0, kind: input, shape index: {}]
  %s1 = inlined_call_operand.hbm [shape: f32[8,36], index: 1, kind: input, shape index: {}]
  %s2 = inlined_call_operand.hbm [shape: f32[8,512], index: 2, kind: output, shape index: {}]
  %s3 = sld [smem:[#allocation0]]
  $region61: #{tpu_custom_call.1} parent=0
    _
  %s5 = ssub.s32 1, %s3
  %s6 = scalar_select 0, %s5, %s3
  $region1: #{tpu_custom_call.1} parent=0
    #allocation5 [shape = 'u8[40960]{0}', space=vmem, size = 0xa000, scoped, tag = 'input window, operand 0']
    #allocation6 [shape = 's32[2]{0}', space=sflag, size = 0x8, scoped, tag = 'scoped memory for tpu_custom_call.1']
    #allocation7 [shape = 's32[2]{0}', space=sflag, size = 0x8, scoped, tag = 'scoped memory for tpu_custom_call.1']
    #allocation8 [shape = 'u8[4096]{0}', space=vmem, size = 0x1000, scoped, tag = 'input window, operand 1, single buffered']
    #allocation9 [shape = 's32[1]{0}', space=sflag, size = 0x4, scoped, tag = 'scoped memory for tpu_custom_call.1']
    #allocation10 [shape = 'u8[8192]{0}', space=vmem, size = 0x2000, scoped, tag = 'output window, operand 0']
    %7 = vsyncpa [#allocation6], 0
    %s8 = scalar_lea.sflag [#allocation6], 1
    %9 = vsyncpa %s8, 0
    %10 = vsyncpa [#allocation9], 0
    %11 = vsyncpa [#allocation7], 0
    %s12 = scalar_lea.sflag [#allocation7], 1
    %13 = vsyncpa %s12, 0
    loop: start=0, step=1, limit=10
    $region2: #{tpu_custom_call.1} parent=1 // loop_pre_header
      _
    $region3: #{tpu_custom_call.1} parent=1 // loop_header
      %s15 = sphi 0, %s19
      %p16 = scmp.ge.s32.totalorder %s15, 10
      %s22 = sphi 0, %s34
      %s23 = sphi 0, %s30
      %s24 = sphi 0, %s22
      %s25 = sphi 0, %s23
      %s26 = sphi 0, %s24
      %s27 = sphi 0, %s25
      %s41 = sphi 0, %s43
      %s44 = sphi 0, %s41
      %s45 = sphi 0, %s44
      %s61 = sphi 0, %s45
      %s65 = sphi 0, %s65
      %s67 = sphi 0, %s65
      %s68 = sphi 0, %s67
      %s82 = sphi 0, %s68
      %s90 = sphi 0, %s92
      %s93 = sphi 0, %s90
      %s94 = sphi 0, %s93
      %s110 = sphi 0, %s94
    $region4: #{tpu_custom_call.1} parent=1 // loop_header_branch
      %18 = sbr.rel (%p16) target = $region8
    $region5: #{tpu_custom_call.1} parent=1 // loop_body
      %s20 = ssub.s32 %s15, 1
      %s21 = ssub.s32 %s15, 2
      %s28 = sadd.s32 1, %s23
      %p29 = scmp.ge.s32.totalorder %s28, 4
      %s30 = scalar_select %p29, 0, %s28
      %s31 = sadd.s32 1, %s22
      %s32 = scalar_select %p29, %s31, %s22
      %p33 = scmp.ge.s32.totalorder %s32, 2
      %s34 = scalar_select %p33, 0, %s32
      %s35 = ssub.s32 1, %s22
      %s36 = smul.u32 %s23, %s35
      %s37 = ssub.s32 1, %s34
      %s38 = smul.u32 %s30, %s37
      %s39 = ssub.s32 %s36, %s38
      %p40 = scmp.eq.s32.totalorder %s39, 0
      %s42 = sadd.s32 %s41, 1
      %s43 = scalar_select %p40, %s41, %s42
      %p46 = pneg %p40
      %p47 = scmp.eq.s32.totalorder %s15, 7
      %p48 = por %p46, %p47
      %p49 = scmp.ne.s32.totalorder %s41, %s44
      %p50 = scmp.eq.s32.totalorder %s15, 0
      %p51 = por %p49, %p50
      %p52 = scmp.ne.s32.totalorder %s41, %s44
      %p53 = scmp.eq.s32.totalorder %s20, 7
      %p54 = por %p52, %p53
      %p55 = scmp.ne.s32.totalorder %s44, %s45
      %p56 = scmp.eq.s32.totalorder %s20, 0
      %p57 = por %p55, %p56
      %p58 = scmp.ne.s32.totalorder %s44, %s45
      %p59 = scmp.eq.s32.totalorder %s21, 7
      %p60 = por %p58, %p59
      %p62 = scmp.ne.s32.totalorder %s45, %s61
      %p63 = scmp.eq.s32.totalorder %s21, 0
      %p64 = por %p62, %p63
      %s66 = sadd.s32 %s65, 1
      %p69 = scmp.eq.s32.totalorder %s15, 7
      %p70 = scmp.ne.s32.totalorder %s65, %s67
      %p71 = scmp.eq.s32.totalorder %s15, 0
      %p72 = por %p70, %p71
      %p73 = scmp.ne.s32.totalorder %s65, %s67
      %p74 = scmp.eq.s32.totalorder %s20, 7
      %p75 = por %p73, %p74
      %p76 = scmp.ne.s32.totalorder %s67, %s68
      %p77 = scmp.eq.s32.totalorder %s20, 0
      %p78 = por %p76, %p77
      %p79 = scmp.ne.s32.totalorder %s67, %s68
      %p80 = scmp.eq.s32.totalorder %s21, 7
      %p81 = por %p79, %p80
      %p83 = scmp.ne.s32.totalorder %s68, %s82
      %p84 = scmp.eq.s32.totalorder %s21, 0
      %p85 = por %p83, %p84
      %s86 = smul.u32 %s23, %s22
      %s87 = smul.u32 %s30, %s34
      %s88 = ssub.s32 %s86, %s87
      %p89 = scmp.eq.s32.totalorder %s88, 0
      %s91 = sadd.s32 %s90, 1
      %s92 = scalar_select %p89, %s90, %s91
      %p95 = pneg %p89
      %p96 = scmp.eq.s32.totalorder %s15, 7
      %p97 = por %p95, %p96
      %p98 = scmp.ne.s32.totalorder %s90, %s93
      %p99 = scmp.eq.s32.totalorder %s15, 0
      %p100 = por %p98, %p99
      %p101 = scmp.ne.s32.totalorder %s90, %s93
      %p102 = scmp.eq.s32.totalorder %s20, 7
      %p103 = por %p101, %p102
      %p104 = scmp.ne.s32.totalorder %s93, %s94
      %p105 = scmp.eq.s32.totalorder %s20, 0
      %p106 = por %p104, %p105
      %p107 = scmp.ne.s32.totalorder %s93, %s94
      %p108 = scmp.eq.s32.totalorder %s21, 7
      %p109 = por %p107, %p108
      %p111 = scmp.ne.s32.totalorder %s94, %s110
      %p112 = scmp.eq.s32.totalorder %s21, 0
      %p113 = por %p111, %p112
      %p114 = scmp.le.s32.totalorder 1, %s15
      %p115 = scmp.lt.s32.totalorder %s15, 9
      %p116 = pnand %p114, %p115
      %p117 = pneg %p116
      // Predicated region
      $region9: #{tpu_custom_call.1} parent=5 // pred_check
        _
      $region10: #{tpu_custom_call.1} parent=5 // pred_check_branch
        %119 = sbr.rel (%p116) target = $region12
      $region11: #{tpu_custom_call.1} parent=5 // pred_region
        %s120 = ssub.s32 %s15, 1
        // Predicated region
        $region13: #{tpu_custom_call.1} parent=11 // pred_check
          %p121 = pneg %p78
        $region14: #{tpu_custom_call.1} parent=11 // pred_check_branch
          %123 = sbr.rel (%p121) target = $region16
        $region15: #{tpu_custom_call.1} parent=11 // pred_region
          %s125 = ssub.s32 128, 128
          %126 = vsyncadd [#allocation9], %s125
          %s128 = sshll.u32 [#allocation8], 4
          %s129 = int_to_ptr.vmem [resolvable:$true] %s128
          %131 = dma.hbm_to_vmem [thread:$0]  %s1, 128, %s129, [#allocation9]
        $region16: #{tpu_custom_call.1} parent=11 // pred_fallthru
          _
      $region12: #{tpu_custom_call.1} parent=5 // pred_fallthru
        _
      %p132 = scmp.lt.s32.totalorder %s15, 8
      // Predicated region
      $region17: #{tpu_custom_call.1} parent=5 // pred_check
        %p133 = pneg %p132
      $region18: #{tpu_custom_call.1} parent=5 // pred_check_branch
        %135 = sbr.rel (%p133) target = $region20
      $region19: #{tpu_custom_call.1} parent=5 // pred_region
        // Predicated region
        $region21: #{tpu_custom_call.1} parent=19 // pred_check
          %p136 = pneg %p51
        $region22: #{tpu_custom_call.1} parent=19 // pred_check_branch
          %138 = sbr.rel (%p136) target = $region24
        $region23: #{tpu_custom_call.1} parent=19 // pred_region
          %s139 = sand.u32 %s41, 1
          %s140 = scalar_lea.sflag [#allocation6], %s139
          %s141 = sand.u32 %s41, 1
          %s142 = smul.addr %s141, 40
          %s143 = scalar_lea.vmem [#allocation5], %s142
          %s144 = ssub.s32 1, %s22
          %s145 = smul.u32 %s23, %s144
          %s147 = ssub.s32 640, 640
          %148 = vsyncadd %s140, %s147
          %s149 = smul.addr %s145, 128
          %s150 = scalar_lea.hbm %s0, %s149
          %s151 = sshll.u32 %s143, 4
          %s152 = int_to_ptr.vmem [resolvable:$true] %s151
          %157 = dma.hbm_to_vmem [thread:$0]  %s150, 640, %s152, %s140, 512, 128, 8
        $region24: #{tpu_custom_call.1} parent=19 // pred_fallthru
          _
      $region20: #{tpu_custom_call.1} parent=5 // pred_fallthru
        _
      %p158 = scmp.le.s32.totalorder 1, %s15
      %p159 = scmp.lt.s32.totalorder %s15, 9
      %p160 = pnand %p158, %p159
      %p161 = pneg %p160
      // Predicated region
      $region25: #{tpu_custom_call.1} parent=5 // pred_check
        _
      $region26: #{tpu_custom_call.1} parent=5 // pred_check_branch
        %163 = sbr.rel (%p160) target = $region28
      $region27: #{tpu_custom_call.1} parent=5 // pred_region
        %s164 = ssub.s32 %s15, 1
        %s165 = sand.u32 %s44, 1
        %s166 = scalar_lea.sflag [#allocation6], %s165
        %s167 = sand.u32 %s44, 1
        %s168 = smul.addr %s167, 40
        %s169 = scalar_lea.vmem [#allocation5], %s168
        // Predicated region
        $region29: #{tpu_custom_call.1} parent=27 // pred_check
          %p170 = pneg %p57
        $region30: #{tpu_custom_call.1} parent=27 // pred_check_branch
          %172 = sbr.rel (%p170) target = $region32
        $region31: #{tpu_custom_call.1} parent=27 // pred_region
          %173 = dma.done %s166, 640
        $region32: #{tpu_custom_call.1} parent=27 // pred_fallthru
          _
        // Predicated region
        $region33: #{tpu_custom_call.1} parent=27 // pred_check
          %p174 = pneg %p78
        $region34: #{tpu_custom_call.1} parent=27 // pred_check_branch
          %176 = sbr.rel (%p174) target = $region36
        $region35: #{tpu_custom_call.1} parent=27 // pred_region
          %177 = dma.done [#allocation9], 128
        $region36: #{tpu_custom_call.1} parent=27 // pred_fallthru
          _
        %s178 = sand.u32 %s44, 1
        %s179 = scalar_lea.sflag [#allocation6], %s178
        %s180 = sand.u32 %s44, 1
        %s181 = smul.addr %s180, 40
        %s182 = scalar_lea.vmem [#allocation5], %s181
        %p183 = pneg %p57
        %p184 = pneg %p54
        %p185 = pneg %p78
        %p186 = pneg %p75
        %p187 = pneg %p106
        %p188 = pneg %p103
        %s189 = sand.u32 %s93, 1
        %s190 = scalar_lea.sflag [#allocation7], %s189
        %s191 = sand.u32 %s93, 1
        %s192 = smul.addr %s191, 8
        %s193 = scalar_lea.vmem [#allocation10], %s192
        %s194 = ssub.s32 1, %s24
        %s195 = smul.u32 %s25, %s194
        %s196 = smul.u32 %s25, %s24
        %p197 = scmp.eq.s32.totalorder %s24, 0
        %p198 = scmp.eq.s32.totalorder %s25, 0
        %p199 = pnand %p197, %p198
        %p200 = pneg %p199
        // Predicated region
        $region37: #{tpu_custom_call.1} parent=27 // pred_check
          _
        $region38: #{tpu_custom_call.1} parent=27 // pred_check_branch
          %202 = sbr.rel (%p199) target = $region40
        $region39: #{tpu_custom_call.1} parent=27 // pred_region
          %203 = vst [vmem:[#allocation3] sm:$0xff] 0.0
          %204 = vst [vmem:[#allocation4] sm:$0xff] 0.0
        $region40: #{tpu_custom_call.1} parent=27 // pred_fallthru
          _
        // Predicated region
        $region41: #{tpu_custom_call.1} parent=27 // pred_check
          %p205 = pneg %p197
        $region42: #{tpu_custom_call.1} parent=27 // pred_check_branch
          %207 = sbr.rel (%p205) target = $region44
        $region43: #{tpu_custom_call.1} parent=27 // pred_region
          %v208 = vld [vmem:[#allocation8] sm:$0xff]
          %v209 = vld [vmem:[%s169] sm:$0xff]
          %v210 = vld [vmem:[%s169 + $0x8] sm:$0xff]
          %v211 = vld [vmem:[%s169 + $0x10] sm:$0xff]
          %v212 = vld [vmem:[%s169 + $0x18] sm:$0xff]
          %v213 = vld [vmem:[%s169 + $0x20] sm:$0xf]
          %vm214 = vcmask 293888
          %v216 = vsel %vm214, %v208, 0
          %vm218 = vcmask 1043456
          %v220 = vsel %vm218, %v213, 0
          %222 = vmatprep.subr.mxu0 0.0
          %223 = vmatpush1.msra.mxu0 0.0
          %224 = vmatprep.subr.mxu0 0.0
          %225 = vmatpush1.msra.mxu0 0.0
          %226 = vmatprep.subr.mxu0 0.0
          %227 = vmatpush1.msra.mxu0 0.0
          %228 = vmatprep.subr.mxu0 0.0
          %229 = vmatpush1.msra.mxu0 0.0
          %230 = vmatprep.subr.mxu0 0.0
          %231 = vmatpush1.msra.mxu0 0.0
          %232 = vmatprep.subr.mxu0 0.0
          %233 = vmatpush1.msra.mxu0 0.0
          %234 = vmatprep.subr.mxu0 0.0
          %235 = vmatpush1.msra.mxu0 0.0
          %236 = vmatprep.subr.mxu0 0.0
          %237 = vmatpush1.msra.mxu0 0.0
          %238 = vmatprep.subr.mxu0 0.0
          %239 = vmatpush1.msra.mxu0 0.0
          %240 = vmatprep.subr.mxu0 0.0
          %241 = vmatpush1.msra.mxu0 0.0
          %242 = vmatprep.subr.mxu0 0.0
          %243 = vmatpush1.msra.mxu0 0.0
          %244 = vmatprep.subr.mxu0 0.0
          %245 = vmatpush1.msra.mxu0 %v220
          %246 = vmatprep.subr.mxu0 0.0
          %247 = vmatpush1.msra.mxu0 %v212
          %248 = vmatprep.subr.mxu0 0.0
          %249 = vmatpush1.msra.mxu0 %v211
          %250 = vmatprep.subr.mxu0 0.0
          %251 = vmatpush1.msra.mxu0 %v210
          %252 = vmatprep.subr.mxu0 0.0
          %253 = vmatpush1.msra.mxu0 %v209
          %254 = vmatprep.subr.mxu0 0.0
          %255 = vmatpush2.msra.mxu0 0.0
          %256 = vmatprep.subr.mxu0 0.0
          %257 = vmatpush2.msra.mxu0 0.0
          %258 = vmatprep.subr.mxu0 0.0
          %259 = vmatpush2.msra.mxu0 0.0
          %260 = vmatprep.subr.mxu0 0.0
          %261 = vmatpush2.msra.mxu0 0.0
          %262 = vmatprep.subr.mxu0 0.0
          %263 = vmatpush2.msra.mxu0 0.0
          %264 = vmatprep.subr.mxu0 0.0
          %265 = vmatpush2.msra.mxu0 0.0
          %266 = vmatprep.subr.mxu0 0.0
          %267 = vmatpush2.msra.mxu0 0.0
          %268 = vmatprep.subr.mxu0 0.0
          %269 = vmatpush2.msra.mxu0 0.0
          %270 = vmatprep.subr.mxu0 0.0
          %271 = vmatpush2.msra.mxu0 0.0
          %272 = vmatprep.subr.mxu0 0.0
          %273 = vmatpush2.msra.mxu0 0.0
          %274 = vmatprep.subr.mxu0 0.0
          %275 = vmatpush2.msra.mxu0 0.0
          %276 = vmatprep.subr.mxu0 0.0
          %277 = vmatpush2.msra.mxu0 0.0
          %278 = vmatprep.subr.mxu0 0.0
          %279 = vmatpush2.msra.mxu0 0.0
          %280 = vmatprep.subr.mxu0 0.0
          %281 = vmatpush2.msra.mxu0 0.0
          %282 = vmatprep.subr.mxu0 0.0
          %283 = vmatpush2.msra.mxu0 0.0
          %284 = vmatprep.subr.mxu0 0.0
          %285 = vmatpush2.msra.mxu0 0.0
          %286 = vmatprep.mubr.f32.mxu0 0.0
          %287 = vmatmul.mubr.f32.gmra.mxu0 %v216
          %v288 = vpop.f32.mrf.mxu0
          %v289 = vadd.f32 0.0, %v288
          %v290 = vpop.f32.mrf.mxu0
          %291 = vdwg.mxu0
          %s292 = smul.u32 %s25, 8
          %s293 = scalar_lea.vmem [#allocation2], %s292
          %294 = vst [vmem:[%s293] sm:$0xff] %v289
          %v295 = vld [vmem:[#allocation3] sm:$0xff]
          %296 = vadd.xlane.f32.xlu0 %v289
          %v297 = vpop.xlane.xlu0 %296
          %v298 = vadd.f32 %v295, %v297
          %vm299 = vcmask 7168
          %300 = vst.msk [vmem:[#allocation3] sm:$0xff] %vm299, %v298
          %v301 = vld [vmem:[#allocation4] sm:$0xff]
          %v302 = vmul.f32 %v289, %v289
          %303 = vadd.xlane.f32.xlu0 %v302
          %v304 = vpop.xlane.xlu0 %303
          %v305 = vadd.f32 %v301, %v304
          %306 = vst.msk [vmem:[#allocation4] sm:$0xff] %vm299, %v305
        $region44: #{tpu_custom_call.1} parent=27 // pred_fallthru
          _
        %p307 = scmp.eq.s32.totalorder %s24, 1
        // Predicated region
        $region45: #{tpu_custom_call.1} parent=27 // pred_check
          %p308 = pneg %p307
        $region46: #{tpu_custom_call.1} parent=27 // pred_check_branch
          %310 = sbr.rel (%p308) target = $region48
        $region47: #{tpu_custom_call.1} parent=27 // pred_region
          %v311 = vld [vmem:[#allocation3] sm:$0xff]
          %v312 = vmul.f32 %v311, 0.001953125
          %v313 = vld [vmem:[#allocation4] sm:$0xff]
          %v314 = vmul.f32 %v313, 0.001953125
          %v315 = vmul.f32 %v312, %v312
          %v316 = vsub.f32 %v314, %v315
          %v317 = vmax.f32 %v316, 0.0
          %v318 = vadd.f32 %v317, 1e-05
          %v319 = vrsqrt.pop %v318
          %v320 = vsub.f32 0.0, %v312
          %v321 = vmul.f32 %v320, %v319
          %s322 = smul.u32 %s25, 8
          %s323 = scalar_lea.vmem [#allocation2], %s322
          %v324 = vld [vmem:[%s323] sm:$0xff]
          %326 = vset.pattern.permute.xlu0 0
          %327 = vperm.xlu0 %326, %v319
          %v328 = vpop.permute.xlu0 %327
          %v330 = vmul.f32 %v324, %v328
          %332 = vset.pattern.permute.xlu0 0
          %333 = vperm.xlu0 %332, %v321
          %v334 = vpop.permute.xlu0 %333
          %v336 = vadd.f32 %v330, %v334
          %v337 = vmax.f32 %v336, 0.0
          %338 = vst [vmem:[%s193] sm:$0xff] %v337
        $region48: #{tpu_custom_call.1} parent=27 // pred_fallthru
          _
        %s339 = sand.u32 %s93, 1
        %s340 = scalar_lea.sflag [#allocation7], %s339
        %s341 = sand.u32 %s93, 1
        %s342 = smul.addr %s341, 8
        %s343 = scalar_lea.vmem [#allocation10], %s342
        // Predicated region
        $region49: #{tpu_custom_call.1} parent=27 // pred_check
          %p344 = pneg %p103
        $region50: #{tpu_custom_call.1} parent=27 // pred_check_branch
          %346 = sbr.rel (%p344) target = $region52
        $region51: #{tpu_custom_call.1} parent=27 // pred_region
          %s347 = smul.u32 %s25, %s24
          %s349 = ssub.s32 128, 128
          %350 = vsyncadd %s340, %s349
          %s351 = smul.addr %s347, 128
          %s352 = scalar_lea.hbm %s2, %s351
          %s354 = sshll.u32 %s343, 4
          %s355 = int_to_ptr.vmem [resolvable:$true] %s354
          %357 = dma.vmem_to_hbm [thread:$0]  %s355, 128, %s352, %s340
        $region52: #{tpu_custom_call.1} parent=27 // pred_fallthru
          _
      $region28: #{tpu_custom_call.1} parent=5 // pred_fallthru
        _
      %p358 = scmp.le.s32.totalorder 2, %s15
      // Predicated region
      $region53: #{tpu_custom_call.1} parent=5 // pred_check
        %p359 = pneg %p358
      $region54: #{tpu_custom_call.1} parent=5 // pred_check_branch
        %361 = sbr.rel (%p359) target = $region56
      $region55: #{tpu_custom_call.1} parent=5 // pred_region
        %s362 = ssub.s32 %s15, 2
        // Predicated region
        $region57: #{tpu_custom_call.1} parent=55 // pred_check
          %p363 = pneg %p109
        $region58: #{tpu_custom_call.1} parent=55 // pred_check_branch
          %365 = sbr.rel (%p363) target = $region60
        $region59: #{tpu_custom_call.1} parent=55 // pred_region
          %s366 = sand.u32 %s94, 1
          %s367 = scalar_lea.sflag [#allocation7], %s366
          %s368 = sand.u32 %s94, 1
          %s369 = smul.addr %s368, 8
          %s370 = scalar_lea.vmem [#allocation10], %s369
          %371 = dma.done %s367, 128
        $region60: #{tpu_custom_call.1} parent=55 // pred_fallthru
          _
      $region56: #{tpu_custom_call.1} parent=5 // pred_fallthru
        _
    $region6: #{tpu_custom_call.1} parent=1 // loop_footer
      %s19 = sadd.s32 1, %s15
    $region7: #{tpu_custom_call.1} parent=1 // loop_footer_branch
      %14 = sbr.rel target = $region3
    $region8: #{tpu_custom_call.1} parent=1 // loop_exit
      _
    %372 = vsyncpa [#allocation6], 1
    %s373 = scalar_lea.sflag [#allocation6], 1
    %374 = vsyncpa %s373, 1
    %375 = vsyncpa [#allocation9], 1
    %376 = vsyncpa [#allocation7], 1
    %s377 = scalar_lea.sflag [#allocation7], 1
    %378 = vsyncpa %s377, 1

</llo_original>
